<compile_context>
chip_gen: v6e
topology: v6e:2x2x1
jax: 0.10.0
libtpu: 0.0.40
codegen_flags: <defaults>
</compile_context>

<pallas_src>
import functools

import jax
import jax.numpy as jnp
from jax.experimental import pallas as pl
from jax.experimental.pallas import tpu as pltpu


def _round_up(a, m):
    return (a + m - 1) // m * m


def _vmem_capacity_bytes():
    """Physical VMEM capacity (v5e/v6e: 128 MiB, v7x: 64 MiB); safe fallback."""
    get_info = getattr(pltpu, "get_tpu_info", None)
    if get_info is not None:
        try:
            cap = getattr(get_info(), "vmem_capacity_bytes", None)
            if cap:
                return int(cap)
        except Exception:
            pass
    return 64 * 1024 * 1024  # conservative (v7x); v5e/v6e have 128 MiB


def _chunk_cols(tT):
    # Lane chunk of the V-reduction: 128 output columns per MXU sub-tile when
    # the T-tile is 128-aligned, else the whole (small) tile.
    return 128 if tT % 128 == 0 else tT


def _block_vmem_bytes(C, OUT, V, tT):
    """Rough per-step VMEM use: double-buffered I/O + resident constants + temps."""
    CH = _chunk_cols(tT)
    item = 4
    x_buf = 2 * _round_up(C, 8) * _round_up(tT * V, 128) * item
    o_buf = 2 * _round_up(OUT, 8) * _round_up(tT, 128) * item
    wt_buf = 2 * _round_up(OUT, 8) * _round_up(C, 128) * item
    r_buf = 2 * _round_up(CH * V, 8) * _round_up(CH, 128) * item
    vb_buf = 2 * 8 * 128 * item
    tmp = (_round_up(C, 8) + 2 * _round_up(OUT, 8)) * _round_up(CH * V, 128) * item
    return x_buf + o_buf + wt_buf + r_buf + vb_buf + tmp


def _choose_t_tile(N, C, T, V, OUT, budget_bytes, min_steps=8):
    """Largest valid T-tile that fits VMEM while keeping >= min_steps grid steps.

    Valid tiles: divisors of T that are either T itself or multiples of 128, so
    the (1, C, tT*V) input block and the (1, OUT, tT) output block both satisfy
    the Mosaic (8, 128) rule with full-width lanes.
    """
    cands = [d for d in range(1, T + 1) if T % d == 0 and (d == T or d % 128 == 0)]
    fits = [d for d in cands if _block_vmem_bytes(C, OUT, V, d) <= budget_bytes]
    if not fits:
        fits = [min(cands)]
    pipelined = [d for d in fits if N * (T // d) >= min_steps]
    return max(pipelined) if pipelined else min(fits)


def _make_kernel(CH, V, n_chunks):
    CHV = CH * V

    def kernel(x_ref, wt_ref, r_ref, vb_ref, o_ref):
        # x_ref : (1, C, tT*V)   native-layout input slab (lanes = T*V axis)
        # wt_ref: (OUT, C)       transposed weight (grid-invariant)
        # r_ref : (CH*V, CH)     V-group summing matrix for one chunk
        # vb_ref: (OUT, 1)       V * bias (hoisted out of the V-sum)
        # o_ref : (1, OUT, tT)   lane-dense output block (transposed layout)
        wt = wt_ref[...]
        r = r_ref[...]
        vb = vb_ref[...]

        def chunk(j, carry):
            in_off = j * CHV
            out_off = j * CH
            if CHV % 128 == 0:
                in_off = pl.multiple_of(in_off, 128)
            if CH % 128 == 0:
                out_off = pl.multiple_of(out_off, 128)
            xj = x_ref[0, :, pl.ds(in_off, CHV)]                            # (C, CH*V)
            zj = jnp.dot(wt, xj, preferred_element_type=jnp.float32)        # (OUT, CH*V)
            yj = jnp.dot(zj, r, preferred_element_type=jnp.float32) + vb    # (OUT, CH)
            o_ref[0, :, pl.ds(out_off, CH)] = yj.astype(o_ref.dtype)
            return carry

        jax.lax.fori_loop(0, n_chunks, chunk, 0, unroll=(n_chunks <= 8))

    return kernel


@functools.partial(jax.jit, static_argnames=("t_tile",))
def sparse_connect(x, w, b, *, t_tile=None):
    """SparseConnect forward (eval mode).

    x: (N, C, T, V) float32 (native layout; x is never transposed in HBM)
    w: (C, OUT) float32;  b: (OUT,) float32.
    Returns (N*T, OUT) float32.
    """
    N, C, T, V = x.shape
    OUT = w.shape[1]

    cap = _vmem_capacity_bytes()
    budget = max(8 * 1024 * 1024, min(int(0.75 * cap), cap - 20 * 1024 * 1024))

    if t_tile is None:
        tT = _choose_t_tile(N, C, T, V, OUT, budget)
    else:
        tT = int(t_tile)
        assert T % tT == 0 and (tT == T or tT % 128 == 0), "invalid t_tile"
    CH = _chunk_cols(tT)
    n_chunks = tT // CH

    vmem_est = _block_vmem_bytes(C, OUT, V, tT)
    vmem_limit = max(32 * 1024 * 1024,
                     min(vmem_est + 8 * 1024 * 1024, cap - 8 * 1024 * 1024))

    # Free reshape (merges trailing dims, no HBM pass) + tiny resident constants.
    x3 = x.reshape(N, C, T * V)
    wt = w.T                                                    # (OUT, C)
    vb = (jnp.float32(V) * b).reshape(OUT, 1)                   # bias applied post-reduction
    r = (jnp.arange(CH * V, dtype=jnp.int32)[:, None] // V
         == jnp.arange(CH, dtype=jnp.int32)[None, :]).astype(x.dtype)   # (CH*V, CH)

    # TODO(synk): casting x3/wt to bf16 here would roughly halve HBM traffic on
    # this bandwidth-bound op; kept f32 to stay bit-comparable to the reference.

    y = pl.pallas_call(
        _make_kernel(CH, V, n_chunks),
        out_shape=jax.ShapeDtypeStruct((N, OUT, T), x.dtype),
        grid=(N, T // tT),
        in_specs=[
            pl.BlockSpec((1, C, tT * V), lambda n, t: (n, 0, t)),   # big contiguous slab
            pl.BlockSpec((OUT, C), lambda n, t: (0, 0)),            # resident w^T
            pl.BlockSpec((CH * V, CH), lambda n, t: (0, 0)),        # resident chunk-R
            pl.BlockSpec((OUT, 1), lambda n, t: (0, 0)),            # resident V*b
        ],
        out_specs=pl.BlockSpec((1, OUT, tT), lambda n, t: (n, 0, t)),
        compiler_params=pltpu.CompilerParams(
            dimension_semantics=("parallel", "parallel"),
            vmem_limit_bytes=int(vmem_limit),
        ),
        cost_estimate=pl.CostEstimate(
            flops=2 * N * T * V * C * OUT,
            transcendentals=0,
            bytes_accessed=4 * (N * C * T * V + C * OUT + N * T * OUT),
        ),
    )(x3, wt, r, vb)

    # Output is tiny relative to the input (OUT vs C*V bytes per (n,t) row):
    # transposing it back to row-major (N*T, OUT) here is cheap layout plumbing
    # and lets the kernel issue full-width unmasked lane stores.
    return jnp.transpose(y, (0, 2, 1)).reshape(N * T, OUT)


def _reference(x, w, b):
    N, C, T, V = x.shape
    x2 = jnp.transpose(x, (0, 2, 3, 1)).reshape(N * T * V, C)
    y = jnp.dot(x2, w, precision=jax.lax.Precision.HIGHEST) + b
    return y.reshape(N * T, V, -1).sum(axis=1)


def _run_case(key, N, C, T, V, OUT, t_tile=None):
    kx, kw, kb = jax.random.split(key, 3)
    x = jax.random.normal(kx, (N, C, T, V), dtype=jnp.float32)
    bound = 1.0 / float(C) ** 0.5                  # nn.Linear default init range
    w = jax.random.uniform(kw, (C, OUT), minval=-bound, maxval=bound,
                           dtype=jnp.float32)
    b = jax.random.uniform(kb, (OUT,), minval=-bound, maxval=bound,
                           dtype=jnp.float32)

    y = jax.block_until_ready(sparse_connect(x, w, b, t_tile=t_tile))
    y_ref = _reference(x, w, b)
    assert y.shape == (N * T, OUT)
    # Default (single-pass bf16) MXU precision vs fp32 reference -> loose tol.
    assert jnp.allclose(y, y_ref, atol=3e-2, rtol=3e-2), "mismatch vs reference"


if __name__ == "__main__":
    key = jax.random.PRNGKey(0)
    k1, k2 = jax.random.split(key)

    # Small shapes consistent with the module: (N, C, T, V), Linear(C -> OUT).
    _run_case(k1, N=2, C=32, T=8, V=4, OUT=16)

    # Exercise the real tiling path: T // t_tile = 2 grid steps along T,
    # t_tile*V = 1024 lanes per slab, and 2 in-kernel reduction chunks.
    _run_case(k2, N=1, C=8, T=512, V=4, OUT=16, t_tile=256)

    print("KERNEL_OK")
</pallas_src>

<mosaic_0001>
module attributes {stable_mosaic.version = 11 : i64} {
  func.func @kernel(%arg0: i32, %arg1: i32, %arg2: memref<1x32x32xf32, #tpu.memory_space<vmem>>, %arg3: memref<16x32xf32, #tpu.memory_space<vmem>>, %arg4: memref<32x8xf32, #tpu.memory_space<vmem>>, %arg5: memref<16x1xf32, #tpu.memory_space<vmem>>, %arg6: memref<1x16x8xf32, #tpu.memory_space<vmem>>) attributes {dimension_semantics = [#tpu.dimension_semantics<parallel>, #tpu.dimension_semantics<parallel>], iteration_bounds = array<i64: 2, 1>, scalar_prefetch = 0 : i64, scratch_operands = 0 : i64, tpu.core_type = #tpu.core_type<tc>, window_params = [{transform_indices = @transform_0, window_bounds = array<i64: 1, 32, 32>}, {pipeline_mode = #tpu.pipeline_mode<synchronous>, transform_indices = @transform_1, window_bounds = array<i64: 16, 32>}, {pipeline_mode = #tpu.pipeline_mode<synchronous>, transform_indices = @transform_2, window_bounds = array<i64: 32, 8>}, {pipeline_mode = #tpu.pipeline_mode<synchronous>, transform_indices = @transform_3, window_bounds = array<i64: 16, 1>}, {transform_indices = @transform_4, window_bounds = array<i64: 1, 16, 8>}]} {
    %c0 = arith.constant 0 : index
    %c0_0 = arith.constant 0 : index
    %0 = vector.load %arg3[%c0, %c0_0] : memref<16x32xf32, #tpu.memory_space<vmem>>, vector<16x32xf32>
    %c0_1 = arith.constant 0 : index
    %c0_2 = arith.constant 0 : index
    %1 = vector.load %arg4[%c0_1, %c0_2] : memref<32x8xf32, #tpu.memory_space<vmem>>, vector<32x8xf32>
    %c0_3 = arith.constant 0 : index
    %c0_4 = arith.constant 0 : index
    %2 = vector.load %arg5[%c0_3, %c0_4] : memref<16x1xf32, #tpu.memory_space<vmem>>, vector<16x1xf32>
    %c0_i32 = arith.constant 0 : i32
    %c32_i32 = arith.constant 32 : i32
    %3 = arith.muli %c0_i32, %c32_i32 : i32
    %c8_i32 = arith.constant 8 : i32
    %4 = arith.muli %c0_i32, %c8_i32 : i32
    %c0_5 = arith.constant 0 : index
    %c0_6 = arith.constant 0 : index
    %5 = arith.index_cast %3 : i32 to index
    %6 = vector.load %arg2[%c0_5, %c0_6, %5] : memref<1x32x32xf32, #tpu.memory_space<vmem>>, vector<1x32x32xf32>
    %7 = vector.shape_cast %6 : vector<1x32x32xf32> to vector<32x32xf32>
    %cst = arith.constant dense<0.000000e+00> : vector<16x32xf32>
    %8 = tpu.matmul %0, %7, %cst {dimension_numbers = #tpu.dot_dimension_numbers<[1], [0], [0], [1], [0, 0, 1, 1], [], []>} : vector<16x32xf32>, vector<32x32xf32>, vector<16x32xf32> -> vector<16x32xf32>
    %cst_7 = arith.constant dense<0.000000e+00> : vector<16x8xf32>
    %9 = tpu.matmul %8, %1, %cst_7 {dimension_numbers = #tpu.dot_dimension_numbers<[1], [0], [0], [1], [0, 0, 1, 1], [], []>} : vector<16x32xf32>, vector<32x8xf32>, vector<16x8xf32> -> vector<16x8xf32>
    %10 = vector.broadcast %2 : vector<16x1xf32> to vector<16x8xf32>
    %11 = arith.addf %9, %10 : vector<16x8xf32>
    %c0_8 = arith.constant 0 : index
    %c0_9 = arith.constant 0 : index
    %12 = arith.index_cast %4 : i32 to index
    %13 = vector.load %arg6[%c0_8, %c0_9, %12] : memref<1x16x8xf32, #tpu.memory_space<vmem>>, vector<1x16x8xf32>
    %14 = vector.shape_cast %13 : vector<1x16x8xf32> to vector<16x8xf32>
    %15 = vector.shape_cast %11 : vector<16x8xf32> to vector<1x16x8xf32>
    tpu.vector_store %arg6[%c0_8, %c0_9, %12], %15 {strides = array<i32>} : memref<1x16x8xf32, #tpu.memory_space<vmem>>, vector<1x16x8xf32>,
    %c1_i32 = arith.constant 1 : i32
    return
  }
  func.func @transform_0(%arg0: i32, %arg1: i32) -> (i32, i32, i32) {
    %c0_i32 = arith.constant 0 : i32
    %c0_i32_0 = arith.constant 0 : i32
    return %arg0, %c0_i32, %arg1 : i32, i32, i32
  }
  func.func @transform_1(%arg0: i32, %arg1: i32) -> (i32, i32) {
    %c0_i32 = arith.constant 0 : i32
    %c0_i32_0 = arith.constant 0 : i32
    %c0_i32_1 = arith.constant 0 : i32
    return %c0_i32, %c0_i32_0 : i32, i32
  }
  func.func @transform_2(%arg0: i32, %arg1: i32) -> (i32, i32) {
    %c0_i32 = arith.constant 0 : i32
    %c0_i32_0 = arith.constant 0 : i32
    %c0_i32_1 = arith.constant 0 : i32
    return %c0_i32, %c0_i32_0 : i32, i32
  }
  func.func @transform_3(%arg0: i32, %arg1: i32) -> (i32, i32) {
    %c0_i32 = arith.constant 0 : i32
    %c0_i32_0 = arith.constant 0 : i32
    %c0_i32_1 = arith.constant 0 : i32
    return %c0_i32, %c0_i32_0 : i32, i32
  }
  func.func @transform_4(%arg0: i32, %arg1: i32) -> (i32, i32, i32) {
    %c0_i32 = arith.constant 0 : i32
    %c0_i32_0 = arith.constant 0 : i32
    return %arg0, %c0_i32, %arg1 : i32, i32, i32
  }
}

</mosaic_0001>

<llo_original>
// kernel: sparse_connect.1
$region0: #{sparse_connect.1}
  #allocation0 [shape = 'u32[]', space=smem, size = 0x4, offset = 0x4, fixed_abs, tag = 'smem constant byte address 0x4 - core index']
  #allocation1 [shape = 'u32[144,128]{1,0:T(1,128)}', space=vmem, size = 0x12000, scoped, tag = 'internal scratch']
  %s0 = inlined_call_operand.vmem [shape: f32[2,32,32], index: 0, kind: input, shape index: {}]
  %s1 = inlined_call_operand.vmem [shape: f32[16,32], index: 1, kind: input, shape index: {}]
  %s2 = inlined_call_operand.vmem [shape: f32[32,8], index: 2, kind: input, shape index: {}]
  %s3 = inlined_call_operand.vmem [shape: f32[16,1], index: 3, kind: input, shape index: {}]
  %s4 = inlined_call_operand.vmem [shape: f32[2,16,8], index: 4, kind: output, shape index: {}]
  %s5 = sld [smem:[#allocation0]]
  $region49: #{sparse_connect.1} parent=0
    _
  %s7 = ssub.s32 1, %s5
  %s8 = scalar_select 0, %s7, %s5
  loop: start=0, step=1, limit=4
  $region2: #{sparse_connect.1} parent=0 // loop_pre_header
    _
  $region3: #{sparse_connect.1} parent=0 // loop_header
    %s10 = sphi 0, %s14
    %p11 = scmp.ge.s32.totalorder %s10, 4
    %s17 = sphi 0, %s29
    %s18 = sphi 0, %s25
    %s19 = sphi 0, %s17
    %s20 = sphi 0, %s18
    %s21 = sphi 0, %s19
    %s22 = sphi 0, %s20
    %s34 = sphi 0, %s36
    %s37 = sphi 0, %s34
    %s38 = sphi 0, %s37
    %s54 = sphi 0, %s38
    %s58 = sphi 0, %s58
    %s60 = sphi 0, %s58
    %s61 = sphi 0, %s60
    %s75 = sphi 0, %s61
    %s79 = sphi 0, %s79
    %s81 = sphi 0, %s79
    %s82 = sphi 0, %s81
    %s96 = sphi 0, %s82
    %s100 = sphi 0, %s100
    %s102 = sphi 0, %s100
    %s103 = sphi 0, %s102
    %s117 = sphi 0, %s103
    %s125 = sphi 0, %s127
    %s128 = sphi 0, %s125
    %s129 = sphi 0, %s128
    %s145 = sphi 0, %s129
  $region4: #{sparse_connect.1} parent=0 // loop_header_branch
    %13 = sbr.rel (%p11) target = $region8
  $region5: #{sparse_connect.1} parent=0 // loop_body
    %s15 = ssub.s32 %s10, 1
    %s16 = ssub.s32 %s10, 2
    %s23 = sadd.s32 1, %s18
    %p24 = scmp.ge.s32.totalorder %s23, 1
    %s25 = scalar_select %p24, 0, %s23
    %s26 = sadd.s32 1, %s17
    %s27 = scalar_select %p24, %s26, %s17
    %p28 = scmp.ge.s32.totalorder %s27, 2
    %s29 = scalar_select %p28, 0, %s27
    %s30 = ssub.s32 %s17, %s29
    %s31 = ssub.s32 %s18, %s25
    %s32 = sor.u32 %s30, %s31
    %p33 = scmp.eq.s32.totalorder %s32, 0
    %s35 = sadd.s32 %s34, 1
    %s36 = scalar_select %p33, %s34, %s35
    %p39 = pneg %p33
    %p40 = scmp.eq.s32.totalorder %s10, 1
    %p41 = por %p39, %p40
    %p42 = scmp.ne.s32.totalorder %s34, %s37
    %p43 = scmp.eq.s32.totalorder %s10, 0
    %p44 = por %p42, %p43
    %p45 = scmp.ne.s32.totalorder %s34, %s37
    %p46 = scmp.eq.s32.totalorder %s15, 1
    %p47 = por %p45, %p46
    %p48 = scmp.ne.s32.totalorder %s37, %s38
    %p49 = scmp.eq.s32.totalorder %s15, 0
    %p50 = por %p48, %p49
    %p51 = scmp.ne.s32.totalorder %s37, %s38
    %p52 = scmp.eq.s32.totalorder %s16, 1
    %p53 = por %p51, %p52
    %p55 = scmp.ne.s32.totalorder %s38, %s54
    %p56 = scmp.eq.s32.totalorder %s16, 0
    %p57 = por %p55, %p56
    %s59 = sadd.s32 %s58, 1
    %p62 = scmp.eq.s32.totalorder %s10, 1
    %p63 = scmp.ne.s32.totalorder %s58, %s60
    %p64 = scmp.eq.s32.totalorder %s10, 0
    %p65 = por %p63, %p64
    %p66 = scmp.ne.s32.totalorder %s58, %s60
    %p67 = scmp.eq.s32.totalorder %s15, 1
    %p68 = por %p66, %p67
    %p69 = scmp.ne.s32.totalorder %s60, %s61
    %p70 = scmp.eq.s32.totalorder %s15, 0
    %p71 = por %p69, %p70
    %p72 = scmp.ne.s32.totalorder %s60, %s61
    %p73 = scmp.eq.s32.totalorder %s16, 1
    %p74 = por %p72, %p73
    %p76 = scmp.ne.s32.totalorder %s61, %s75
    %p77 = scmp.eq.s32.totalorder %s16, 0
    %p78 = por %p76, %p77
    %s80 = sadd.s32 %s79, 1
    %p83 = scmp.eq.s32.totalorder %s10, 1
    %p84 = scmp.ne.s32.totalorder %s79, %s81
    %p85 = scmp.eq.s32.totalorder %s10, 0
    %p86 = por %p84, %p85
    %p87 = scmp.ne.s32.totalorder %s79, %s81
    %p88 = scmp.eq.s32.totalorder %s15, 1
    %p89 = por %p87, %p88
    %p90 = scmp.ne.s32.totalorder %s81, %s82
    %p91 = scmp.eq.s32.totalorder %s15, 0
    %p92 = por %p90, %p91
    %p93 = scmp.ne.s32.totalorder %s81, %s82
    %p94 = scmp.eq.s32.totalorder %s16, 1
    %p95 = por %p93, %p94
    %p97 = scmp.ne.s32.totalorder %s82, %s96
    %p98 = scmp.eq.s32.totalorder %s16, 0
    %p99 = por %p97, %p98
    %s101 = sadd.s32 %s100, 1
    %p104 = scmp.eq.s32.totalorder %s10, 1
    %p105 = scmp.ne.s32.totalorder %s100, %s102
    %p106 = scmp.eq.s32.totalorder %s10, 0
    %p107 = por %p105, %p106
    %p108 = scmp.ne.s32.totalorder %s100, %s102
    %p109 = scmp.eq.s32.totalorder %s15, 1
    %p110 = por %p108, %p109
    %p111 = scmp.ne.s32.totalorder %s102, %s103
    %p112 = scmp.eq.s32.totalorder %s15, 0
    %p113 = por %p111, %p112
    %p114 = scmp.ne.s32.totalorder %s102, %s103
    %p115 = scmp.eq.s32.totalorder %s16, 1
    %p116 = por %p114, %p115
    %p118 = scmp.ne.s32.totalorder %s103, %s117
    %p119 = scmp.eq.s32.totalorder %s16, 0
    %p120 = por %p118, %p119
    %s121 = ssub.s32 %s17, %s29
    %s122 = ssub.s32 %s18, %s25
    %s123 = sor.u32 %s121, %s122
    %p124 = scmp.eq.s32.totalorder %s123, 0
    %s126 = sadd.s32 %s125, 1
    %s127 = scalar_select %p124, %s125, %s126
    %p130 = pneg %p124
    %p131 = scmp.eq.s32.totalorder %s10, 1
    %p132 = por %p130, %p131
    %p133 = scmp.ne.s32.totalorder %s125, %s128
    %p134 = scmp.eq.s32.totalorder %s10, 0
    %p135 = por %p133, %p134
    %p136 = scmp.ne.s32.totalorder %s125, %s128
    %p137 = scmp.eq.s32.totalorder %s15, 1
    %p138 = por %p136, %p137
    %p139 = scmp.ne.s32.totalorder %s128, %s129
    %p140 = scmp.eq.s32.totalorder %s15, 0
    %p141 = por %p139, %p140
    %p142 = scmp.ne.s32.totalorder %s128, %s129
    %p143 = scmp.eq.s32.totalorder %s16, 1
    %p144 = por %p142, %p143
    %p146 = scmp.ne.s32.totalorder %s129, %s145
    %p147 = scmp.eq.s32.totalorder %s16, 0
    %p148 = por %p146, %p147
    %p149 = scmp.le.s32.totalorder 1, %s10
    %p150 = scmp.lt.s32.totalorder %s10, 3
    %p151 = pnand %p149, %p150
    %p152 = pneg %p151
    // Predicated region
    $region9: #{sparse_connect.1} parent=5 // pred_check
      _
    $region10: #{sparse_connect.1} parent=5 // pred_check_branch
      %154 = sbr.rel (%p151) target = $region12
    $region11: #{sparse_connect.1} parent=5 // pred_region
      %s155 = ssub.s32 %s10, 1
      // Predicated region
      $region13: #{sparse_connect.1} parent=11 // pred_check
        %p156 = pneg %p71
      $region14: #{sparse_connect.1} parent=11 // pred_check_branch
        %158 = sbr.rel (%p156) target = $region16
      $region15: #{sparse_connect.1} parent=11 // pred_region
        _
      $region16: #{sparse_connect.1} parent=11 // pred_fallthru
        _
      // Predicated region
      $region17: #{sparse_connect.1} parent=11 // pred_check
        %p159 = pneg %p92
      $region18: #{sparse_connect.1} parent=11 // pred_check_branch
        %161 = sbr.rel (%p159) target = $region20
      $region19: #{sparse_connect.1} parent=11 // pred_region
        _
      $region20: #{sparse_connect.1} parent=11 // pred_fallthru
        _
      // Predicated region
      $region21: #{sparse_connect.1} parent=11 // pred_check
        %p162 = pneg %p113
      $region22: #{sparse_connect.1} parent=11 // pred_check_branch
        %164 = sbr.rel (%p162) target = $region24
      $region23: #{sparse_connect.1} parent=11 // pred_region
        _
      $region24: #{sparse_connect.1} parent=11 // pred_fallthru
        _
    $region12: #{sparse_connect.1} parent=5 // pred_fallthru
      _
    %p165 = scmp.lt.s32.totalorder %s10, 2
    // Predicated region
    $region25: #{sparse_connect.1} parent=5 // pred_check
      %p166 = pneg %p165
    $region26: #{sparse_connect.1} parent=5 // pred_check_branch
      %168 = sbr.rel (%p166) target = $region28
    $region27: #{sparse_connect.1} parent=5 // pred_region
      // Predicated region
      $region29: #{sparse_connect.1} parent=27 // pred_check
        %p169 = pneg %p44
      $region30: #{sparse_connect.1} parent=27 // pred_check_branch
        %171 = sbr.rel (%p169) target = $region32
      $region31: #{sparse_connect.1} parent=27 // pred_region
        %p172 = scmp.lt.s32.totalorder %s17, 1
        %s173 = scalar_select %p172, %s17, 1
        %p174 = scmp.lt.s32.totalorder %s18, 0
        %s175 = scalar_select %p174, %s18, 0
        %s176 = smul.addr %s173, 4
        %s177 = sadd.s32 %s175, %s176
        %s178 = smul.addr %s177, 8
        %s179 = scalar_lea.vmem %s0, %s178
      $region32: #{sparse_connect.1} parent=27 // pred_fallthru
        _
    $region28: #{sparse_connect.1} parent=5 // pred_fallthru
      _
    %p180 = scmp.le.s32.totalorder 1, %s10
    %p181 = scmp.lt.s32.totalorder %s10, 3
    %p182 = pnand %p180, %p181
    %p183 = pneg %p182
    // Predicated region
    $region33: #{sparse_connect.1} parent=5 // pred_check
      _
    $region34: #{sparse_connect.1} parent=5 // pred_check_branch
      %185 = sbr.rel (%p182) target = $region36
    $region35: #{sparse_connect.1} parent=5 // pred_region
      %s186 = ssub.s32 %s10, 1
      %p187 = scmp.lt.s32.totalorder %s19, 1
      %s188 = scalar_select %p187, %s19, 1
      %p189 = scmp.lt.s32.totalorder %s20, 0
      %s190 = scalar_select %p189, %s20, 0
      %s191 = smul.addr %s188, 4
      %s192 = sadd.s32 %s190, %s191
      %s193 = smul.addr %s192, 8
      %s194 = scalar_lea.vmem %s0, %s193
      %p195 = pneg %p50
      %p196 = pneg %p47
      %p197 = pneg %p71
      %p198 = pneg %p68
      %p199 = pneg %p92
      %p200 = pneg %p89
      %p201 = pneg %p113
      %p202 = pneg %p110
      %p203 = pneg %p141
      %p204 = pneg %p138
      %p205 = scmp.lt.s32.totalorder %s19, 1
      %s206 = scalar_select %p205, %s19, 1
      %p207 = scmp.lt.s32.totalorder %s20, 0
      %s208 = scalar_select %p207, %s20, 0
      %s209 = smul.addr %s206, 2
      %s210 = sadd.s32 %s208, %s209
      %s211 = smul.addr %s210, 8
      %s212 = scalar_lea.vmem %s4, %s211
      %p213 = scmp.lt.s32.totalorder %s19, 1
      %s214 = scalar_select %p213, %s19, 1
      %p215 = scmp.lt.s32.totalorder %s20, 0
      %s216 = scalar_select %p215, %s20, 0
      %s217 = smul.addr %s214, 4
      %s218 = sadd.s32 %s216, %s217
      %s219 = smul.addr %s218, 8
      %s220 = scalar_lea.vmem %s0, %s219
      %p221 = scmp.lt.s32.totalorder %s19, 1
      %s222 = scalar_select %p221, %s19, 1
      %p223 = scmp.lt.s32.totalorder %s20, 0
      %s224 = scalar_select %p223, %s20, 0
      %s225 = smul.addr %s222, 2
      %s226 = sadd.s32 %s224, %s225
      %s227 = smul.addr %s226, 8
      %s228 = scalar_lea.vmem %s4, %s227
      %v229 = vld [vmem:[%s1] sm:$0xff]
      %v230 = vld [vmem:[%s1 + $0x8] sm:$0xff]
      %v231 = vld [vmem:[%s2] sm:$0xff]
      %v232 = vld [vmem:[%s2 + $0x8] sm:$0xff]
      %v233 = vld [vmem:[%s2 + $0x10] sm:$0xff]
      %v234 = vld [vmem:[%s2 + $0x18] sm:$0xff]
      %v235 = vld [vmem:[%s3] sm:$0xff]
      %v236 = vld [vmem:[%s3 + $0x8] sm:$0xff]
      %v237 = vld [vmem:[%s220] sm:$0xff]
      %v238 = vld [vmem:[%s220 + $0x8] sm:$0xff]
      %v239 = vld [vmem:[%s220 + $0x10] sm:$0xff]
      %v240 = vld [vmem:[%s220 + $0x18] sm:$0xff]
      %vm241 = vcmask 261120
      %v243 = vsel %vm241, %v229, 0
      %v246 = vsel %vm241, %v230, 0
      %248 = vmatprep.subr.mxu0 0.0
      %249 = vmatpush1.msra.mxu0 0.0
      %250 = vmatprep.subr.mxu0 0.0
      %251 = vmatpush1.msra.mxu0 0.0
      %252 = vmatprep.subr.mxu0 0.0
      %253 = vmatpush1.msra.mxu0 0.0
      %254 = vmatprep.subr.mxu0 0.0
      %255 = vmatpush1.msra.mxu0 0.0
      %256 = vmatprep.subr.mxu0 0.0
      %257 = vmatpush1.msra.mxu0 0.0
      %258 = vmatprep.subr.mxu0 0.0
      %259 = vmatpush1.msra.mxu0 0.0
      %260 = vmatprep.subr.mxu0 0.0
      %261 = vmatpush1.msra.mxu0 0.0
      %262 = vmatprep.subr.mxu0 0.0
      %263 = vmatpush1.msra.mxu0 0.0
      %264 = vmatprep.subr.mxu0 0.0
      %265 = vmatpush1.msra.mxu0 0.0
      %266 = vmatprep.subr.mxu0 0.0
      %267 = vmatpush1.msra.mxu0 0.0
      %268 = vmatprep.subr.mxu0 0.0
      %269 = vmatpush1.msra.mxu0 0.0
      %270 = vmatprep.subr.mxu0 0.0
      %271 = vmatpush1.msra.mxu0 0.0
      %272 = vmatprep.subr.mxu0 0.0
      %273 = vmatpush1.msra.mxu0 %v240
      %274 = vmatprep.subr.mxu0 0.0
      %275 = vmatpush1.msra.mxu0 %v239
      %276 = vmatprep.subr.mxu0 0.0
      %277 = vmatpush1.msra.mxu0 %v238
      %278 = vmatprep.subr.mxu0 0.0
      %279 = vmatpush1.msra.mxu0 %v237
      %280 = vmatprep.subr.mxu0 0.0
      %281 = vmatpush2.msra.mxu0 0.0
      %282 = vmatprep.subr.mxu0 0.0
      %283 = vmatpush2.msra.mxu0 0.0
      %284 = vmatprep.subr.mxu0 0.0
      %285 = vmatpush2.msra.mxu0 0.0
      %286 = vmatprep.subr.mxu0 0.0
      %287 = vmatpush2.msra.mxu0 0.0
      %288 = vmatprep.subr.mxu0 0.0
      %289 = vmatpush2.msra.mxu0 0.0
      %290 = vmatprep.subr.mxu0 0.0
      %291 = vmatpush2.msra.mxu0 0.0
      %292 = vmatprep.subr.mxu0 0.0
      %293 = vmatpush2.msra.mxu0 0.0
      %294 = vmatprep.subr.mxu0 0.0
      %295 = vmatpush2.msra.mxu0 0.0
      %296 = vmatprep.subr.mxu0 0.0
      %297 = vmatpush2.msra.mxu0 0.0
      %298 = vmatprep.subr.mxu0 0.0
      %299 = vmatpush2.msra.mxu0 0.0
      %300 = vmatprep.subr.mxu0 0.0
      %301 = vmatpush2.msra.mxu0 0.0
      %302 = vmatprep.subr.mxu0 0.0
      %303 = vmatpush2.msra.mxu0 0.0
      %304 = vmatprep.subr.mxu0 0.0
      %305 = vmatpush2.msra.mxu0 0.0
      %306 = vmatprep.subr.mxu0 0.0
      %307 = vmatpush2.msra.mxu0 0.0
      %308 = vmatprep.subr.mxu0 0.0
      %309 = vmatpush2.msra.mxu0 0.0
      %310 = vmatprep.subr.mxu0 0.0
      %311 = vmatpush2.msra.mxu0 0.0
      %312 = vmatprep.mubr.f32.mxu0 0.0
      %313 = vmatmul.mubr.f32.gmra.mxu0 %v243
      %v314 = vpop.f32.mrf.mxu0
      %v315 = vadd.f32 0.0, %v314
      %v316 = vpop.f32.mrf.mxu0
      %317 = vmatprep.mubr.f32.mxu0 0.0
      %318 = vmatmul.mubr.f32.gmra.mxu0 %v246
      %v319 = vpop.f32.mrf.mxu0
      %v320 = vadd.f32 0.0, %v319
      %v321 = vpop.f32.mrf.mxu0
      %322 = vdwg.mxu0
      %324 = vset.pattern.permute.xlu0 0
      %325 = vperm.xlu0 %324, %v235
      %v326 = vpop.permute.xlu0 %325
      %329 = vset.pattern.permute.xlu0 0
      %330 = vperm.xlu0 %329, %v236
      %v331 = vpop.permute.xlu0 %330
      %v334 = vsel %vm241, %v315, 0
      %v337 = vsel %vm241, %v320, 0
      %339 = vmatprep.subr.mxu0 0.0
      %340 = vmatpush1.msra.mxu0 0.0
      %341 = vmatprep.subr.mxu0 0.0
      %342 = vmatpush1.msra.mxu0 0.0
      %343 = vmatprep.subr.mxu0 0.0
      %344 = vmatpush1.msra.mxu0 0.0
      %345 = vmatprep.subr.mxu0 0.0
      %346 = vmatpush1.msra.mxu0 0.0
      %347 = vmatprep.subr.mxu0 0.0
      %348 = vmatpush1.msra.mxu0 0.0
      %349 = vmatprep.subr.mxu0 0.0
      %350 = vmatpush1.msra.mxu0 0.0
      %351 = vmatprep.subr.mxu0 0.0
      %352 = vmatpush1.msra.mxu0 0.0
      %353 = vmatprep.subr.mxu0 0.0
      %354 = vmatpush1.msra.mxu0 0.0
      %355 = vmatprep.subr.mxu0 0.0
      %356 = vmatpush1.msra.mxu0 0.0
      %357 = vmatprep.subr.mxu0 0.0
      %358 = vmatpush1.msra.mxu0 0.0
      %359 = vmatprep.subr.mxu0 0.0
      %360 = vmatpush1.msra.mxu0 0.0
      %361 = vmatprep.subr.mxu0 0.0
      %362 = vmatpush1.msra.mxu0 0.0
      %363 = vmatprep.subr.mxu0 0.0
      %364 = vmatpush1.msra.mxu0 %v234
      %365 = vmatprep.subr.mxu0 0.0
      %366 = vmatpush1.msra.mxu0 %v233
      %367 = vmatprep.subr.mxu0 0.0
      %368 = vmatpush1.msra.mxu0 %v232
      %369 = vmatprep.subr.mxu0 0.0
      %370 = vmatpush1.msra.mxu0 %v231
      %371 = vmatprep.subr.mxu0 0.0
      %372 = vmatpush2.msra.mxu0 0.0
      %373 = vmatprep.subr.mxu0 0.0
      %374 = vmatpush2.msra.mxu0 0.0
      %375 = vmatprep.subr.mxu0 0.0
      %376 = vmatpush2.msra.mxu0 0.0
      %377 = vmatprep.subr.mxu0 0.0
      %378 = vmatpush2.msra.mxu0 0.0
      %379 = vmatprep.subr.mxu0 0.0
      %380 = vmatpush2.msra.mxu0 0.0
      %381 = vmatprep.subr.mxu0 0.0
      %382 = vmatpush2.msra.mxu0 0.0
      %383 = vmatprep.subr.mxu0 0.0
      %384 = vmatpush2.msra.mxu0 0.0
      %385 = vmatprep.subr.mxu0 0.0
      %386 = vmatpush2.msra.mxu0 0.0
      %387 = vmatprep.subr.mxu0 0.0
      %388 = vmatpush2.msra.mxu0 0.0
      %389 = vmatprep.subr.mxu0 0.0
      %390 = vmatpush2.msra.mxu0 0.0
      %391 = vmatprep.subr.mxu0 0.0
      %392 = vmatpush2.msra.mxu0 0.0
      %393 = vmatprep.subr.mxu0 0.0
      %394 = vmatpush2.msra.mxu0 0.0
      %395 = vmatprep.subr.mxu0 0.0
      %396 = vmatpush2.msra.mxu0 0.0
      %397 = vmatprep.subr.mxu0 0.0
      %398 = vmatpush2.msra.mxu0 0.0
      %399 = vmatprep.subr.mxu0 0.0
      %400 = vmatpush2.msra.mxu0 0.0
      %401 = vmatprep.subr.mxu0 0.0
      %402 = vmatpush2.msra.mxu0 0.0
      %403 = vmatprep.mubr.f32.mxu0 0.0
      %404 = vmatmul.mubr.f32.gmra.mxu0 %v334
      %v405 = vpop.f32.mrf.mxu0
      %v406 = vadd.f32 %v326, %v405
      %v407 = vpop.f32.mrf.mxu0
      %408 = vmatprep.mubr.f32.mxu0 0.0
      %409 = vmatmul.mubr.f32.gmra.mxu0 %v337
      %v410 = vpop.f32.mrf.mxu0
      %v411 = vadd.f32 %v331, %v410
      %v412 = vpop.f32.mrf.mxu0
      %413 = vdwg.mxu0
      %vm414 = vcmask 64512
      %415 = vst.msk [vmem:[%s228] sm:$0xff] %vm414, %v406
      %416 = vst.msk [vmem:[%s228 + $0x8] sm:$0xff] %vm414, %v411
      %p417 = scmp.lt.s32.totalorder %s19, 1
      %s418 = scalar_select %p417, %s19, 1
      %p419 = scmp.lt.s32.totalorder %s20, 0
      %s420 = scalar_select %p419, %s20, 0
      %s421 = smul.addr %s418, 2
      %s422 = sadd.s32 %s420, %s421
      %s423 = smul.addr %s422, 8
      %s424 = scalar_lea.vmem %s4, %s423
      // Predicated region
      $region37: #{sparse_connect.1} parent=35 // pred_check
        %p425 = pneg %p138
      $region38: #{sparse_connect.1} parent=35 // pred_check_branch
        %427 = sbr.rel (%p425) target = $region40
      $region39: #{sparse_connect.1} parent=35 // pred_region
        _
      $region40: #{sparse_connect.1} parent=35 // pred_fallthru
        _
    $region36: #{sparse_connect.1} parent=5 // pred_fallthru
      _
    %p428 = scmp.le.s32.totalorder 2, %s10
    // Predicated region
    $region41: #{sparse_connect.1} parent=5 // pred_check
      %p429 = pneg %p428
    $region42: #{sparse_connect.1} parent=5 // pred_check_branch
      %431 = sbr.rel (%p429) target = $region44
    $region43: #{sparse_connect.1} parent=5 // pred_region
      %s432 = ssub.s32 %s10, 2
      // Predicated region
      $region45: #{sparse_connect.1} parent=43 // pred_check
        %p433 = pneg %p144
      $region46: #{sparse_connect.1} parent=43 // pred_check_branch
        %435 = sbr.rel (%p433) target = $region48
      $region47: #{sparse_connect.1} parent=43 // pred_region
        %p436 = scmp.lt.s32.totalorder %s21, 1
        %s437 = scalar_select %p436, %s21, 1
        %p438 = scmp.lt.s32.totalorder %s22, 0
        %s439 = scalar_select %p438, %s22, 0
        %s440 = smul.addr %s437, 2
        %s441 = sadd.s32 %s439, %s440
        %s442 = smul.addr %s441, 8
        %s443 = scalar_lea.vmem %s4, %s442
      $region48: #{sparse_connect.1} parent=43 // pred_fallthru
        _
    $region44: #{sparse_connect.1} parent=5 // pred_fallthru
      _
  $region6: #{sparse_connect.1} parent=0 // loop_footer
    %s14 = sadd.s32 1, %s10
  $region7: #{sparse_connect.1} parent=0 // loop_footer_branch
    %9 = sbr.rel target = $region3
  $region8: #{sparse_connect.1} parent=0 // loop_exit
    _

</llo_original>
